<compile_context>
chip_gen: v7x
topology: tpu7x:2x2x1
jax: 0.10.0
libtpu: 0.0.40
codegen_flags: <defaults>
</compile_context>

<pallas_src>
import jax
import jax.numpy as jnp
from jax.experimental import pallas as pl
from jax.experimental.pallas import tpu as pltpu


def _vmem_capacity_bytes():
    """Physical VMEM per TensorCore, with robust fallbacks."""
    try:
        cap = int(pltpu.get_tpu_info().vmem_capacity_bytes)
        if cap > 0:
            return cap
    except Exception:
        pass
    try:
        kind = jax.devices()[0].device_kind.lower()
        if "v7" in kind:
            return 64 * 1024 * 1024           # v7x: 64 MiB per TensorCore
        return 128 * 1024 * 1024              # v5e / v6e: 128 MiB
    except Exception:
        return 64 * 1024 * 1024               # most restrictive known part


def _lsa_compute(x, sb, w, out_ref):
    """x, sb: (Bb, N, D) native dtype; w: (1, D); out_ref: (Bb, D)."""
    bb, n, d = x.shape
    w_row = w.astype(sb.dtype).reshape(1, 1, d)

    # feat2score: native-dtype multiply, f32-accumulated lane reduction (VPU + XLU).
    scores = jnp.sum(sb * w_row, axis=-1, dtype=jnp.float32)        # (Bb, N)

    # softmax over the group axis N (exact divide to preserve tight tolerances).
    m = jnp.max(scores, axis=-1, keepdims=True)                     # (Bb, 1)
    e = jnp.exp(scores - m)                                         # (Bb, N)
    probs = e / jnp.sum(e, axis=-1, keepdims=True)                  # (Bb, N) f32

    # Weighted aggregation on the VPU, f32 accumulation; probs stay in f32
    # (no downcast) and no degenerate M=1 MXU matmul.
    agg = jnp.sum(x * probs[:, :, None], axis=1)                    # (Bb, D) f32
    out_ref[...] = agg.astype(out_ref.dtype)


def _lsa_kernel_shared(x_ref, w_ref, out_ref):
    # score_basis is x: read the tile once and reuse it (no duplicate DMA).
    x = x_ref[...]
    _lsa_compute(x, x, w_ref[...], out_ref)


def _lsa_kernel_separate(x_ref, sb_ref, w_ref, out_ref):
    _lsa_compute(x_ref[...], sb_ref[...], w_ref[...], out_ref)


def learned_soft_aggregate(x, w, score_basis=None, group_dim=1, keepdim=False):
    """x: (B, N, D) float array. w: (1, D) Linear(num_feat, 1, bias=False) weight."""
    assert x.ndim == 3 and group_dim == 1, (
        "kernel implements the (B, N, num_feat), group_dim=1 configuration")
    B, N, D = x.shape
    assert w.shape == (1, D), w.shape

    # Early-return path of the PyTorch module (pure glue, no compute).
    if N == 1:
        return x if keepdim else jnp.squeeze(x, axis=group_dim)

    shared = score_basis is None
    if not shared:
        assert score_basis.shape == x.shape, (score_basis.shape, x.shape)
    n_streams = 1 if shared else 2

    itemsize = jnp.dtype(x.dtype).itemsize
    pack = max(8, 32 // itemsize)               # sublane packing: 8 f32 / 16 bf16 / 32 int8

    # ---- VMEM budget: double-buffered inputs + f32 temporaries + output ----
    phys = _vmem_capacity_bytes()
    vmem_limit = (phys * 3) // 4                # ~96 MiB on 128-MiB parts, ~48 MiB on v7x
    budget = vmem_limit - (4 << 20)             # headroom for compiler-internal scratch
    per_row = (2 * n_streams * N * D * itemsize  # double-buffered input streams
               + 2 * N * D * 4                   # in-kernel f32 temporaries (conservative)
               + 2 * D * itemsize                # double-buffered output rows
               + 16 * N)                         # scores / probs rows
    bb_max = max(1, budget // per_row)

    if bb_max >= B:
        if B >= 2 * pack:
            # Whole batch fits, but keep >=2 grid steps so dual-TC chips (v7x)
            # can shard the "parallel" axis; costs one ~0.35us step elsewhere.
            Bb = -(-((B + 1) // 2) // pack) * pack
            Bb = min(Bb, B)
        else:
            Bb = B                              # single full-batch block (Bb == B is legal)
    else:
        Bb = (bb_max // pack) * pack
        if Bb == 0:
            # TODO(synk): for extreme N*D, split N/D inside the kernel
            # (pltpu.emit_pipeline) instead of overshooting the per-row budget.
            Bb = pack
            vmem_limit = max(vmem_limit,
                             min(phys - (4 << 20), per_row * Bb + (8 << 20)))

    grid = (pl.cdiv(B, Bb),)                    # partial last block: masked, no jnp.pad

    x_spec = pl.BlockSpec((Bb, N, D), lambda i: (i, 0, 0))
    w_spec = pl.BlockSpec((1, D), lambda i: (0, 0))
    out_spec = pl.BlockSpec((Bb, D), lambda i: (i, 0))   # lane-dense (.., D) output slab

    if shared:
        kernel = _lsa_kernel_shared
        in_specs = [x_spec, w_spec]
        operands = (x, w)
    else:
        kernel = _lsa_kernel_separate
        in_specs = [x_spec, x_spec, w_spec]
        operands = (x, score_basis, w)

    out = pl.pallas_call(
        kernel,
        out_shape=jax.ShapeDtypeStruct((B, D), x.dtype),
        grid_spec=pltpu.PrefetchScalarGridSpec(
            num_scalar_prefetch=0,
            grid=grid,
            in_specs=in_specs,
            out_specs=out_spec,
        ),
        compiler_params=pltpu.CompilerParams(
            dimension_semantics=("parallel",),
            vmem_limit_bytes=int(vmem_limit),
        ),
    )(*operands)

    if keepdim:
        out = out[:, None, :]
    return out


def _reference(x, w, score_basis=None, group_dim=1, keepdim=False):
    if score_basis is None:
        score_basis = x
    scores = jnp.einsum("bnd,od->bno", score_basis, w)      # (B, N, 1)
    probs = jax.nn.softmax(scores, axis=group_dim)
    return jnp.sum(x * probs, axis=group_dim, keepdims=keepdim)


if __name__ == "__main__":
    key = jax.random.PRNGKey(0)
    kx, kw, ks, kx2 = jax.random.split(key, 4)

    B, N, D = 2, 8, 32                     # batch, group axis, num_feat
    x = jax.random.normal(kx, (B, N, D), dtype=jnp.float32)
    # nn.Linear(num_feat, 1, bias=False) default init: uniform(-1/sqrt(D), 1/sqrt(D))
    bound = 1.0 / (D ** 0.5)
    w = jax.random.uniform(kw, (1, D), dtype=jnp.float32, minval=-bound, maxval=bound)
    sb = jax.random.normal(ks, (B, N, D), dtype=jnp.float32)

    # Common path: score_basis=None -> x is streamed once (shared kernel).
    out1 = jax.block_until_ready(learned_soft_aggregate(x, w))
    ref1 = _reference(x, w)
    assert out1.shape == (B, D), out1.shape
    assert jnp.allclose(out1, ref1, atol=1e-5, rtol=1e-5), float(jnp.max(jnp.abs(out1 - ref1)))

    # Explicit score_basis + keepdim path.
    out2 = jax.block_until_ready(
        learned_soft_aggregate(x, w, score_basis=sb, keepdim=True))
    ref2 = _reference(x, w, score_basis=sb, keepdim=True)
    assert out2.shape == (B, 1, D), out2.shape
    assert jnp.allclose(out2, ref2, atol=1e-5, rtol=1e-5), float(jnp.max(jnp.abs(out2 - ref2)))

    # Non-divisible batch: exercises the pad-free partial-block tail (B=20 -> Bb=16, grid=2).
    B3 = 20
    x3 = jax.random.normal(kx2, (B3, N, D), dtype=jnp.float32)
    out3 = jax.block_until_ready(learned_soft_aggregate(x3, w))
    ref3 = _reference(x3, w)
    assert out3.shape == (B3, D), out3.shape
    assert jnp.allclose(out3, ref3, atol=1e-5, rtol=1e-5), float(jnp.max(jnp.abs(out3 - ref3)))

    print("KERNEL_OK")
</pallas_src>

<mosaic_0001>
module attributes {stable_mosaic.version = 11 : i64} {
  func.func @_lsa_kernel_shared(%arg0: i32, %arg1: memref<2x8x32xf32, #tpu.memory_space<vmem>>, %arg2: memref<1x32xf32, #tpu.memory_space<vmem>>, %arg3: memref<2x32xf32, #tpu.memory_space<vmem>>) attributes {dimension_semantics = [#tpu.dimension_semantics<parallel>], iteration_bounds = array<i64: 1>, scalar_prefetch = 0 : i64, scratch_operands = 0 : i64, tpu.core_type = #tpu.core_type<tc>, window_params = [{transform_indices = @transform_0, window_bounds = array<i64: 2, 8, 32>}, {pipeline_mode = #tpu.pipeline_mode<synchronous>, transform_indices = @transform_1, window_bounds = array<i64: 1, 32>}, {transform_indices = @transform_2, window_bounds = array<i64: 2, 32>}]} {
    %c0 = arith.constant 0 : index
    %c0_0 = arith.constant 0 : index
    %c0_1 = arith.constant 0 : index
    %0 = vector.load %arg1[%c0, %c0_0, %c0_1] : memref<2x8x32xf32, #tpu.memory_space<vmem>>, vector<2x8x32xf32>
    %c0_2 = arith.constant 0 : index
    %c0_3 = arith.constant 0 : index
    %1 = vector.load %arg2[%c0_2, %c0_3] : memref<1x32xf32, #tpu.memory_space<vmem>>, vector<1x32xf32>
    %2 = vector.shape_cast %1 : vector<1x32xf32> to vector<1x1x32xf32>
    %3 = vector.broadcast %2 : vector<1x1x32xf32> to vector<2x8x32xf32>
    %4 = arith.mulf %0, %3 : vector<2x8x32xf32>
    %cst = arith.constant dense<0.000000e+00> : vector<2x8xf32>
    %5 = vector.multi_reduction <add>, %4, %cst [2] : vector<2x8x32xf32> to vector<2x8xf32>
    %cst_4 = arith.constant dense<0xFF800000> : vector<2xf32>
    %6 = vector.multi_reduction <maximumf>, %5, %cst_4 [1] : vector<2x8xf32> to vector<2xf32>
    %7 = vector.shape_cast %6 : vector<2xf32> to vector<2x1xf32>
    %8 = vector.broadcast %7 : vector<2x1xf32> to vector<2x8xf32>
    %9 = arith.subf %5, %8 : vector<2x8xf32>
    %10 = math.exp %9 : vector<2x8xf32>
    %cst_5 = arith.constant dense<0.000000e+00> : vector<2xf32>
    %11 = vector.multi_reduction <add>, %10, %cst_5 [1] : vector<2x8xf32> to vector<2xf32>
    %12 = vector.shape_cast %11 : vector<2xf32> to vector<2x1xf32>
    %13 = vector.broadcast %12 : vector<2x1xf32> to vector<2x8xf32>
    %14 = arith.divf %10, %13 : vector<2x8xf32>
    %15 = vector.shape_cast %14 : vector<2x8xf32> to vector<2x8x1xf32>
    %16 = vector.broadcast %15 : vector<2x8x1xf32> to vector<2x8x32xf32>
    %17 = arith.mulf %0, %16 : vector<2x8x32xf32>
    %cst_6 = arith.constant dense<0.000000e+00> : vector<2x32xf32>
    %18 = vector.multi_reduction <add>, %17, %cst_6 [1] : vector<2x8x32xf32> to vector<2x32xf32>
    %c0_7 = arith.constant 0 : index
    %c0_8 = arith.constant 0 : index
    %19 = vector.load %arg3[%c0_7, %c0_8] : memref<2x32xf32, #tpu.memory_space<vmem>>, vector<2x32xf32>
    tpu.vector_store %arg3[%c0_7, %c0_8], %18 {strides = array<i32>} : memref<2x32xf32, #tpu.memory_space<vmem>>, vector<2x32xf32>,
    return
  }
  func.func @transform_0(%arg0: i32) -> (i32, i32, i32) {
    %c0_i32 = arith.constant 0 : i32
    %c0_i32_0 = arith.constant 0 : i32
    %c0_i32_1 = arith.constant 0 : i32
    return %arg0, %c0_i32, %c0_i32_0 : i32, i32, i32
  }
  func.func @transform_1(%arg0: i32) -> (i32, i32) {
    %c0_i32 = arith.constant 0 : i32
    %c0_i32_0 = arith.constant 0 : i32
    %c0_i32_1 = arith.constant 0 : i32
    return %c0_i32, %c0_i32_0 : i32, i32
  }
  func.func @transform_2(%arg0: i32) -> (i32, i32) {
    %c0_i32 = arith.constant 0 : i32
    %c0_i32_0 = arith.constant 0 : i32
    return %arg0, %c0_i32 : i32, i32
  }
}

</mosaic_0001>

<llo_original>
// kernel: tpu_custom_call.1
$region0: #{tpu_custom_call.1}
  #allocation0 [shape = 'u32[]', space=smem, size = 0x4, offset = 0x4, fixed_abs, tag = 'smem constant byte address 0x4 - core index']
  #allocation1 [shape = 'u32[144,128]{1,0:T(1,128)}', space=vmem, size = 0x12000, scoped, tag = 'internal scratch']
  %s0 = inlined_call_operand.hbm [shape: f32[2,8,32], index: 0, kind: input, shape index: {}]
  %s1 = inlined_call_operand.hbm [shape: f32[1,32], index: 1, kind: input, shape index: {}]
  %s2 = inlined_call_operand.hbm [shape: f32[2,32], index: 2, kind: output, shape index: {}]
  %s3 = sld [smem:[#allocation0]]
  $region26: #{tpu_custom_call.1} parent=0
    _
  %s5 = ssub.s32 1, %s3
  %s6 = scalar_select 0, %s5, %s3
  $region1: #{tpu_custom_call.1} parent=0
    #allocation2 [shape = 'u8[8192]{0}', space=vmem, size = 0x2000, scoped, tag = 'input window, operand 0, single buffered']
    #allocation3 [shape = 's32[1]{0}', space=sflag, size = 0x4, scoped, tag = 'scoped memory for tpu_custom_call.1']
    #allocation4 [shape = 's32[1]{0}', space=sflag, size = 0x4, scoped, tag = 'scoped memory for tpu_custom_call.1']
    #allocation5 [shape = 'u8[512]{0}', space=vmem, size = 0x400, scoped, tag = 'input window, operand 1, single buffered']
    #allocation6 [shape = 's32[1]{0}', space=sflag, size = 0x4, scoped, tag = 'scoped memory for tpu_custom_call.1']
    #allocation7 [shape = 'u8[1024]{0}', space=vmem, size = 0x400, scoped, tag = 'output window, operand 0, single buffered']
    %7 = vsyncpa [#allocation3], 0
    %8 = vsyncpa [#allocation6], 0
    %9 = vsyncpa [#allocation4], 0
    // Predicated region
    $region2: #{tpu_custom_call.1} parent=1 // pred_check
      _
    $region3: #{tpu_custom_call.1} parent=1 // pred_check_branch
      %11 = sbr.rel (0) target = $region5
    $region4: #{tpu_custom_call.1} parent=1 // pred_region
      %s13 = ssub.s32 256, 256
      %14 = vsyncadd [#allocation3], %s13
      %s15 = sshll.u32 [#allocation2], 4
      %s16 = int_to_ptr.vmem [resolvable:$true] %s15
      %21 = dma.hbm_to_vmem [thread:$0]  %s0, 256, %s16, [#allocation3], 128, 128, 8
    $region5: #{tpu_custom_call.1} parent=1 // pred_fallthru
      _
    // Predicated region
    $region6: #{tpu_custom_call.1} parent=1 // pred_check
      _
    $region7: #{tpu_custom_call.1} parent=1 // pred_check_branch
      %23 = sbr.rel (0) target = $region9
    $region8: #{tpu_custom_call.1} parent=1 // pred_region
      %s25 = ssub.s32 16, 16
      %26 = vsyncadd [#allocation6], %s25
      %s28 = sshll.u32 [#allocation5], 4
      %s29 = int_to_ptr.vmem [resolvable:$true] %s28
      %31 = dma.hbm_to_vmem [thread:$0]  %s1, 16, %s29, [#allocation6]
    $region9: #{tpu_custom_call.1} parent=1 // pred_fallthru
      _
    // Predicated region
    $region10: #{tpu_custom_call.1} parent=1 // pred_check
      _
    $region11: #{tpu_custom_call.1} parent=1 // pred_check_branch
      %33 = sbr.rel (0) target = $region13
    $region12: #{tpu_custom_call.1} parent=1 // pred_region
      %34 = dma.done [#allocation3], 256
    $region13: #{tpu_custom_call.1} parent=1 // pred_fallthru
      _
    // Predicated region
    $region14: #{tpu_custom_call.1} parent=1 // pred_check
      _
    $region15: #{tpu_custom_call.1} parent=1 // pred_check_branch
      %36 = sbr.rel (0) target = $region17
    $region16: #{tpu_custom_call.1} parent=1 // pred_region
      %37 = dma.done [#allocation6], 16
    $region17: #{tpu_custom_call.1} parent=1 // pred_fallthru
      _
    %v38 = vld [vmem:[#allocation2] sm:$0xff]
    %v39 = vld [vmem:[#allocation2 + $0x8] sm:$0xff]
    %v40 = vld [vmem:[#allocation5] sm:$0x1]
    %v42 = vlaneseq
    %v43 = vshrl.u32 %v42, 7
    %v44 = vsub.s32 0, %v43
    %v45 = vrot.slane %v40, %v44
    %v47 = vmul.f32 %v38, %v45
    %v48 = vmul.f32 %v39, %v45
    %vm49 = vcmask 261120
    %v50 = vsel %vm49, %v47, 0.0
    %51 = vadd.xlane.f32.xlu0 %v50
    %v52 = vpop.xlane.xlu0 %51
    %v53 = vsel %vm49, %v48, 0.0
    %54 = vadd.xlane.f32.xlu0 %v53
    %v55 = vpop.xlane.xlu0 %54
    %v58 = vlaneseq
    %v59 = vand.u32 %v58, 127
    %v60 = vlaneseq
    %v61 = vshrl.u32 %v60, 7
    %v62 = vsub.s32 %v59, %v61
    %v63 = vrot.slane %v52, %v62
    %v64 = vlaneseq
    %v65 = vshrl.u32 %v64, 7
    %v66 = vsub.s32 %v59, %v65
    %v67 = vrot.slane %v55, %v66
    %vm68 = vcmask 1041409
    %v69 = vsel %vm68, %v67, %v63
    %vm71 = vcmask 58368
    %v72 = vsel %vm71, %v69, -inf
    %73 = vmax.xlane.f32.xlu0 %v72
    %v74 = vpop.xlane.xlu0 %73
    %v76 = vlaneseq
    %v77 = vshrl.u32 %v76, 7
    %v78 = vsub.s32 0, %v77
    %v79 = vrot.slane %v74, %v78
    %v80 = vlaneseq
    %v81 = vshrl.u32 %v80, 7
    %v82 = vsub.s32 1, %v81
    %v83 = vrot.slane %v74, %v82
    %v86 = vsub.f32 %v52, %v79
    %v87 = vsub.f32 %v55, %v83
    %v88 = vmul.f32 %v86, 1.442695
    %v89 = vpow.pop %v88
    %v90 = vmul.f32 %v87, 1.442695
    %v91 = vpow.pop %v90
    %94 = vset.pattern.permute.xlu0 0
    %95 = vperm.xlu0 %94, %v89
    %v96 = vpop.permute.xlu0 %95
    %97 = vset.pattern.permute.xlu0 0
    %98 = vperm.xlu0 %97, %v91
    %v99 = vpop.permute.xlu0 %98
    %v100 = vlaneseq
    %v101 = vshrl.u32 %v100, 7
    %v102 = vsub.s32 %v59, %v101
    %v103 = vrot.slane %v96, %v102
    %v104 = vlaneseq
    %v105 = vshrl.u32 %v104, 7
    %v106 = vsub.s32 %v59, %v105
    %v107 = vrot.slane %v99, %v106
    %v108 = vsel %vm68, %v107, %v103
    %v110 = vsel %vm71, %v108, 0.0
    %111 = vadd.xlane.f32.xlu0 %v110
    %v112 = vpop.xlane.xlu0 %111
    %v114 = vlaneseq
    %v115 = vshrl.u32 %v114, 7
    %v116 = vsub.s32 0, %v115
    %v117 = vrot.slane %v112, %v116
    %v118 = vlaneseq
    %v119 = vshrl.u32 %v118, 7
    %v120 = vsub.s32 1, %v119
    %v121 = vrot.slane %v112, %v120
    %v124 = vrcp.pop %v117
    %v125 = vmul.f32 %v89, %v124
    %v126 = vrcp.pop %v121
    %v127 = vmul.f32 %v91, %v126
    %129 = vset.pattern.permute.xlu0 0
    %130 = vperm.xlu0 %129, %v125
    %v131 = vpop.permute.xlu0 %130
    %134 = vset.pattern.permute.xlu0 0
    %135 = vperm.xlu0 %134, %v127
    %v136 = vpop.permute.xlu0 %135
    %v138 = vmul.f32 %v38, %v131
    %v139 = vmul.f32 %v39, %v136
    %v140 = vsel %vm49, %v138, 0.0
    %v141 = vrot.slane %v140, 4
    %v142 = vadd.f32 %v140, %v141
    %v143 = vrot.slane %v142, 2
    %v144 = vadd.f32 %v142, %v143
    %v145 = vrot.slane %v144, 1
    %v146 = vadd.f32 %v144, %v145
    %v147 = vsel %vm49, %v139, 0.0
    %v148 = vrot.slane %v147, 4
    %v149 = vadd.f32 %v147, %v148
    %v150 = vrot.slane %v149, 2
    %v151 = vadd.f32 %v149, %v150
    %v152 = vrot.slane %v151, 1
    %v153 = vadd.f32 %v151, %v152
    %v156 = vsel %vm68, %v153, %v146
    %vm158 = vcmask 254976
    %159 = vst.msk [vmem:[#allocation7] sm:$0x3] %vm158, %v156
    // Predicated region
    $region18: #{tpu_custom_call.1} parent=1 // pred_check
      _
    $region19: #{tpu_custom_call.1} parent=1 // pred_check_branch
      %161 = sbr.rel (0) target = $region21
    $region20: #{tpu_custom_call.1} parent=1 // pred_region
      %s163 = ssub.s32 32, 32
      %164 = vsyncadd [#allocation4], %s163
      %s166 = sshll.u32 [#allocation7], 4
      %s167 = int_to_ptr.vmem [resolvable:$true] %s166
      %169 = dma.vmem_to_hbm [thread:$0]  %s167, 32, %s2, [#allocation4]
    $region21: #{tpu_custom_call.1} parent=1 // pred_fallthru
      _
    // Predicated region
    $region22: #{tpu_custom_call.1} parent=1 // pred_check
      _
    $region23: #{tpu_custom_call.1} parent=1 // pred_check_branch
      %171 = sbr.rel (0) target = $region25
    $region24: #{tpu_custom_call.1} parent=1 // pred_region
      %172 = dma.done [#allocation4], 32
    $region25: #{tpu_custom_call.1} parent=1 // pred_fallthru
      _
    %173 = vsyncpa [#allocation3], 1
    %174 = vsyncpa [#allocation6], 1
    %175 = vsyncpa [#allocation4], 1

</llo_original>
